<compile_context>
chip_gen: v7x
topology: tpu7x:2x2x1
jax: 0.10.0
libtpu: 0.0.40
codegen_flags: <defaults>
</compile_context>

<pallas_src>
import jax
import jax.numpy as jnp
from jax import lax
from jax.experimental import pallas as pl
from jax.experimental.pallas import tpu as pltpu


LANE = 128            # lane width: hidden dim padded to a multiple of this.
MAX_BATCH_TILE = 512  # rows per grid step (multiple of 128); sweep 512-2048
                      # for large batches; small batches collapse to 1 step.
                      # (v7x: keep batch/BATCH_TILE >= 4 so both TCs pipeline.)


def _round_up(n, m):
    return ((n + m - 1) // m) * m


def mlp_kernel(x_ref, w1t_ref, b1_ref, w2_ref, b2_ref, o_ref):
    # Cast activations to bf16 in-kernel (no HBM staging pass in the wrapper).
    x_bf = x_ref[...].astype(jnp.bfloat16)                      # (BT, in_f)

    # Layer 1 on the MXU, contracting the minor (feature) dim of both operands
    # ("A @ B^T" form):  hT[h, b] = sum_k w1t[h, k] * x[b, k].
    h_t = lax.dot_general(
        w1t_ref[...], x_bf,
        dimension_numbers=(((1,), (1,)), ((), ())),
        preferred_element_type=jnp.float32)                     # (hid_p, BT) f32

    # Bias (broadcast over lanes) + ReLU, all f32 on the VPU.
    h_t = jnp.maximum(h_t + b1_ref[...], 0.0)

    # Layer 2 (out_features == 1) on the MXU: (1, hid_p) @ (hid_p, BT).
    y = jnp.dot(w2_ref[...], h_t.astype(jnp.bfloat16),
                preferred_element_type=jnp.float32)             # (1, BT) f32
    y = y + b2_ref[...]

    # Sigmoid via tanh (EUP slot, numerically stable); store the lane-dense
    # (1, 1, BT) slab — 4 bytes of real payload per batch row.
    o_ref[...] = (0.5 * (jnp.tanh(0.5 * y) + 1.0))[None].astype(o_ref.dtype)


def prepare_params(w1, b1, w2, b2):
    """One-time pad/cast of the Linear parameters (call ONCE, outside the
    jitted forward).  PyTorch-native layouts: w1 (hid, in), b1 (hid,),
    w2 (1, hid), b2 (1,)."""
    hid, in_f = w1.shape
    assert w2.shape == (1, hid), "demo net has a single sigmoid output unit"
    hid_p = _round_up(hid, LANE)
    w1t_p = jnp.zeros((hid_p, in_f), jnp.bfloat16).at[:hid, :].set(
        w1.astype(jnp.bfloat16))
    b1_col = jnp.zeros((hid_p, 1), jnp.float32).at[:hid, 0].set(
        b1.astype(jnp.float32))
    w2_row = jnp.zeros((1, hid_p), jnp.bfloat16).at[0, :hid].set(
        w2[0].astype(jnp.bfloat16))
    b2_mat = b2.reshape(1, 1).astype(jnp.float32)
    return w1t_p, b1_col, w2_row, b2_mat


@jax.jit
def model_forward(x, w1t_p, b1_col, w2_row, b2_mat):
    """Fused Linear->ReLU->Linear->Sigmoid, gridded over the batch dim.

    x      : [batch, in]   f32 (raw, un-staged)
    w1t_p  : [hid_p, in]   bf16 (pre-padded, PyTorch (out,in) layout)
    b1_col : [hid_p, 1]    f32
    w2_row : [1, hid_p]    bf16
    b2_mat : [1, 1]        f32
    returns [batch, 1]     f32
    """
    batch, in_f = x.shape
    hid_p = w1t_p.shape[0]

    # Batch tile: big enough to amortize per-step overhead, single step for
    # small (demo) batches.  Must be a multiple of 128 (lane-dense output).
    bt = min(MAX_BATCH_TILE, _round_up(batch, LANE))
    num_tiles = (batch + bt - 1) // bt

    out = pl.pallas_call(
        mlp_kernel,
        out_shape=jax.ShapeDtypeStruct((num_tiles, 1, bt), jnp.float32),
        grid_spec=pltpu.PrefetchScalarGridSpec(
            num_scalar_prefetch=0,
            grid=(num_tiles,),
            in_specs=[
                pl.BlockSpec((bt, in_f), lambda i: (i, 0)),      # x tile
                pl.BlockSpec((hid_p, in_f), lambda i: (0, 0)),   # w1^T resident
                pl.BlockSpec((hid_p, 1), lambda i: (0, 0)),      # b1 resident
                pl.BlockSpec((1, hid_p), lambda i: (0, 0)),      # w2 resident
                pl.BlockSpec((1, 1), lambda i: (0, 0)),          # b2 resident
            ],
            out_specs=pl.BlockSpec((1, 1, bt), lambda i: (i, 0, 0)),
        ),
        compiler_params=pltpu.CompilerParams(
            dimension_semantics=("parallel",),   # megacore sharding on v7x
        ),
    )(x, w1t_p, b1_col, w2_row, b2_mat)

    # Tiny post-kernel fixup: drop padded batch positions, restore [batch, 1].
    return out.reshape(-1)[:batch].reshape(batch, 1)


def init_params(key, in_features, hidden, out_features=1):
    """PyTorch nn.Linear-style init, PyTorch-native (out, in) layouts."""
    k1, k2, k3, k4 = jax.random.split(key, 4)
    bound1 = 1.0 / (in_features ** 0.5)
    bound2 = 1.0 / (hidden ** 0.5)
    w1 = jax.random.uniform(k1, (hidden, in_features), jnp.float32, -bound1, bound1)
    b1 = jax.random.uniform(k2, (hidden,), jnp.float32, -bound1, bound1)
    w2 = jax.random.uniform(k3, (out_features, hidden), jnp.float32, -bound2, bound2)
    b2 = jax.random.uniform(k4, (out_features,), jnp.float32, -bound2, bound2)
    return w1, b1, w2, b2


def reference_forward(x, w1, b1, w2, b2):
    """Pure-JAX reference mirroring the kernel's bf16-operand / f32-accum dots."""
    h = lax.dot_general(x.astype(jnp.bfloat16), w1.astype(jnp.bfloat16),
                        (((1,), (1,)), ((), ())),
                        preferred_element_type=jnp.float32) + b1
    h = jnp.maximum(h, 0.0)
    y = lax.dot_general(h.astype(jnp.bfloat16), w2.astype(jnp.bfloat16),
                        (((1,), (1,)), ((), ())),
                        preferred_element_type=jnp.float32) + b2
    return jax.nn.sigmoid(y)


if __name__ == "__main__":
    key = jax.random.PRNGKey(0)
    kx, kp = jax.random.split(key)

    batch, in_features, hidden, out_features = 256, 32, 64, 1
    x = jax.random.normal(kx, (batch, in_features), jnp.float32)
    w1, b1, w2, b2 = init_params(kp, in_features, hidden, out_features)

    # One-time parameter prep (outside the jitted forward, per review).
    params = prepare_params(w1, b1, w2, b2)

    out = jax.block_until_ready(model_forward(x, *params))

    ref = reference_forward(x, w1, b1, w2, b2)
    assert out.shape == (batch, out_features)
    assert jnp.allclose(out, ref, atol=2e-3, rtol=2e-3)

    # TODO(synk): the torchkeras `Model` wrapper's training/metrics machinery
    # (compile/fit/evaluate/predict/summary) is host-side orchestration with
    # no kernel equivalent; only forward() is implemented.
    print("KERNEL_OK")
</pallas_src>

<mosaic_0001>
module attributes {stable_mosaic.version = 11 : i64} {
  func.func @mlp_kernel(%arg0: i32, %arg1: memref<256x32xf32, #tpu.memory_space<vmem>>, %arg2: memref<128x32xbf16, #tpu.memory_space<vmem>>, %arg3: memref<128x1xf32, #tpu.memory_space<vmem>>, %arg4: memref<1x128xbf16, #tpu.memory_space<vmem>>, %arg5: memref<1x1xf32, #tpu.memory_space<vmem>>, %arg6: memref<1x1x256xf32, #tpu.memory_space<vmem>>) attributes {dimension_semantics = [#tpu.dimension_semantics<parallel>], iteration_bounds = array<i64: 1>, scalar_prefetch = 0 : i64, scratch_operands = 0 : i64, tpu.core_type = #tpu.core_type<tc>, window_params = [{transform_indices = @transform_0, window_bounds = array<i64: 256, 32>}, {pipeline_mode = #tpu.pipeline_mode<synchronous>, transform_indices = @transform_1, window_bounds = array<i64: 128, 32>}, {pipeline_mode = #tpu.pipeline_mode<synchronous>, transform_indices = @transform_2, window_bounds = array<i64: 128, 1>}, {pipeline_mode = #tpu.pipeline_mode<synchronous>, transform_indices = @transform_3, window_bounds = array<i64: 1, 128>}, {pipeline_mode = #tpu.pipeline_mode<synchronous>, transform_indices = @transform_4, window_bounds = array<i64: 1, 1>}, {transform_indices = @transform_5, window_bounds = array<i64: 1, 1, 256>}]} {
    %c0 = arith.constant 0 : index
    %c0_0 = arith.constant 0 : index
    %0 = vector.load %arg1[%c0, %c0_0] : memref<256x32xf32, #tpu.memory_space<vmem>>, vector<256x32xf32>
    %1 = arith.truncf %0 : vector<256x32xf32> to vector<256x32xbf16>
    %c0_1 = arith.constant 0 : index
    %c0_2 = arith.constant 0 : index
    %2 = vector.load %arg2[%c0_1, %c0_2] : memref<128x32xbf16, #tpu.memory_space<vmem>>, vector<128x32xbf16>
    %cst = arith.constant dense<0.000000e+00> : vector<128x256xf32>
    %3 = tpu.matmul %2, %1, %cst {dimension_numbers = #tpu.dot_dimension_numbers<[1], [1], [0], [0], [0, 0, 1, 0], [], []>} : vector<128x32xbf16>, vector<256x32xbf16>, vector<128x256xf32> -> vector<128x256xf32>
    %c0_3 = arith.constant 0 : index
    %c0_4 = arith.constant 0 : index
    %4 = vector.load %arg3[%c0_3, %c0_4] : memref<128x1xf32, #tpu.memory_space<vmem>>, vector<128x1xf32>
    %5 = vector.broadcast %4 : vector<128x1xf32> to vector<128x256xf32>
    %6 = arith.addf %3, %5 : vector<128x256xf32>
    %cst_5 = arith.constant 0.000000e+00 : f32
    %7 = vector.broadcast %cst_5 : f32 to vector<128x256xf32>
    %8 = arith.maximumf %6, %7 : vector<128x256xf32>
    %c0_6 = arith.constant 0 : index
    %c0_7 = arith.constant 0 : index
    %9 = vector.load %arg4[%c0_6, %c0_7] : memref<1x128xbf16, #tpu.memory_space<vmem>>, vector<1x128xbf16>
    %10 = arith.truncf %8 : vector<128x256xf32> to vector<128x256xbf16>
    %cst_8 = arith.constant dense<0.000000e+00> : vector<1x256xf32>
    %11 = tpu.matmul %9, %10, %cst_8 {dimension_numbers = #tpu.dot_dimension_numbers<[1], [0], [0], [1], [0, 0, 1, 1], [], []>} : vector<1x128xbf16>, vector<128x256xbf16>, vector<1x256xf32> -> vector<1x256xf32>
    %c0_9 = arith.constant 0 : index
    %c0_10 = arith.constant 0 : index
    %12 = vector.load %arg5[%c0_9, %c0_10] : memref<1x1xf32, #tpu.memory_space<vmem>>, vector<1x1xf32>
    %13 = vector.broadcast %12 : vector<1x1xf32> to vector<1x256xf32>
    %14 = arith.addf %11, %13 : vector<1x256xf32>
    %cst_11 = arith.constant 5.000000e-01 : f32
    %15 = vector.broadcast %cst_11 : f32 to vector<1x256xf32>
    %16 = arith.mulf %15, %14 : vector<1x256xf32>
    %17 = math.tanh %16 : vector<1x256xf32>
    %cst_12 = arith.constant 1.000000e+00 : f32
    %18 = vector.broadcast %cst_12 : f32 to vector<1x256xf32>
    %19 = arith.addf %17, %18 : vector<1x256xf32>
    %cst_13 = arith.constant 5.000000e-01 : f32
    %20 = vector.broadcast %cst_13 : f32 to vector<1x256xf32>
    %21 = arith.mulf %20, %19 : vector<1x256xf32>
    %22 = vector.shape_cast %21 : vector<1x256xf32> to vector<1x1x256xf32>
    %c0_14 = arith.constant 0 : index
    %c0_15 = arith.constant 0 : index
    %c0_16 = arith.constant 0 : index
    %23 = vector.load %arg6[%c0_14, %c0_15, %c0_16] : memref<1x1x256xf32, #tpu.memory_space<vmem>>, vector<1x1x256xf32>
    tpu.vector_store %arg6[%c0_14, %c0_15, %c0_16], %22 {strides = array<i32>} : memref<1x1x256xf32, #tpu.memory_space<vmem>>, vector<1x1x256xf32>,
    return
  }
  func.func @transform_0(%arg0: i32) -> (i32, i32) {
    %c0_i32 = arith.constant 0 : i32
    %c0_i32_0 = arith.constant 0 : i32
    return %arg0, %c0_i32 : i32, i32
  }
  func.func @transform_1(%arg0: i32) -> (i32, i32) {
    %c0_i32 = arith.constant 0 : i32
    %c0_i32_0 = arith.constant 0 : i32
    %c0_i32_1 = arith.constant 0 : i32
    return %c0_i32, %c0_i32_0 : i32, i32
  }
  func.func @transform_2(%arg0: i32) -> (i32, i32) {
    %c0_i32 = arith.constant 0 : i32
    %c0_i32_0 = arith.constant 0 : i32
    %c0_i32_1 = arith.constant 0 : i32
    return %c0_i32, %c0_i32_0 : i32, i32
  }
  func.func @transform_3(%arg0: i32) -> (i32, i32) {
    %c0_i32 = arith.constant 0 : i32
    %c0_i32_0 = arith.constant 0 : i32
    %c0_i32_1 = arith.constant 0 : i32
    return %c0_i32, %c0_i32_0 : i32, i32
  }
  func.func @transform_4(%arg0: i32) -> (i32, i32) {
    %c0_i32 = arith.constant 0 : i32
    %c0_i32_0 = arith.constant 0 : i32
    %c0_i32_1 = arith.constant 0 : i32
    return %c0_i32, %c0_i32_0 : i32, i32
  }
  func.func @transform_5(%arg0: i32) -> (i32, i32, i32) {
    %c0_i32 = arith.constant 0 : i32
    %c0_i32_0 = arith.constant 0 : i32
    %c0_i32_1 = arith.constant 0 : i32
    return %arg0, %c0_i32, %c0_i32_0 : i32, i32, i32
  }
}

</mosaic_0001>

<llo_original>
// kernel: model_forward.1
$region0: #{model_forward.1}
  #allocation0 [shape = 'u32[]', space=smem, size = 0x4, offset = 0x4, fixed_abs, tag = 'smem constant byte address 0x4 - core index']
  #allocation1 [shape = 'u32[144,128]{1,0:T(1,128)}', space=vmem, size = 0x12000, scoped, tag = 'internal scratch']
  #allocation2 [shape = 'f32[1,1]{1,0:T(1,128)S(1)}', space=vmem, size = 0x200, scoped, tag = 'scoped memory for model_forward.1']
  %s0 = inlined_call_operand.vmem [shape: f32[256,32], index: 0, kind: input, shape index: {}]
  %s1 = inlined_call_operand.vmem [shape: bf16[128,32], index: 1, kind: input, shape index: {}]
  %s2 = inlined_call_operand.vmem [shape: f32[128,1], index: 2, kind: input, shape index: {}]
  %s3 = inlined_call_operand.vmem [shape: bf16[1,128], index: 3, kind: input, shape index: {}]
  %s4 = inlined_call_operand.<no memory space> [shape: f32[1,1], index: 4, kind: input, shape index: {}]
  %s5 = inlined_call_operand.hbm [shape: f32[1,1,256], index: 5, kind: output, shape index: {}]
  %s6 = sld [smem:[#allocation0]]
  $region30: #{model_forward.1} parent=0
    _
  %s8 = ssub.s32 1, %s6
  %s9 = scalar_select 0, %s8, %s6
  %v10 = vstv %s4
  %11 = vst [vmem:[#allocation2] sm:$0x1] %v10
  $region1: #{model_forward.1} parent=0
    #allocation3 [shape = 'u8[1024]{0}', space=vmem, size = 0x400, scoped, tag = 'output window, operand 0, single buffered']
    #allocation4 [shape = 's32[1]{0}', space=sflag, size = 0x4, scoped, tag = 'scoped memory for model_forward.1']
    %12 = vsyncpa [#allocation4], 0
    // Predicated region
    $region2: #{model_forward.1} parent=1 // pred_check
      _
    $region3: #{model_forward.1} parent=1 // pred_check_branch
      %14 = sbr.rel (0) target = $region5
    $region4: #{model_forward.1} parent=1 // pred_region
      _
    $region5: #{model_forward.1} parent=1 // pred_fallthru
      _
    // Predicated region
    $region6: #{model_forward.1} parent=1 // pred_check
      _
    $region7: #{model_forward.1} parent=1 // pred_check_branch
      %16 = sbr.rel (0) target = $region9
    $region8: #{model_forward.1} parent=1 // pred_region
      _
    $region9: #{model_forward.1} parent=1 // pred_fallthru
      _
    // Predicated region
    $region10: #{model_forward.1} parent=1 // pred_check
      _
    $region11: #{model_forward.1} parent=1 // pred_check_branch
      %18 = sbr.rel (0) target = $region13
    $region12: #{model_forward.1} parent=1 // pred_region
      _
    $region13: #{model_forward.1} parent=1 // pred_fallthru
      _
    // Predicated region
    $region14: #{model_forward.1} parent=1 // pred_check
      _
    $region15: #{model_forward.1} parent=1 // pred_check_branch
      %20 = sbr.rel (0) target = $region17
    $region16: #{model_forward.1} parent=1 // pred_region
      _
    $region17: #{model_forward.1} parent=1 // pred_fallthru
      _
    // Predicated region
    $region18: #{model_forward.1} parent=1 // pred_check
      _
    $region19: #{model_forward.1} parent=1 // pred_check_branch
      %22 = sbr.rel (0) target = $region21
    $region20: #{model_forward.1} parent=1 // pred_region
      _
    $region21: #{model_forward.1} parent=1 // pred_fallthru
      _
    %v24 = vld [vmem:[%s0] sm:$0xff]
    %v25 = vld [vmem:[%s0 + $0x8] sm:$0xff]
    %v26 = vld [vmem:[%s0 + $0x10] sm:$0xff]
    %v27 = vld [vmem:[%s0 + $0x18] sm:$0xff]
    %v28 = vld [vmem:[%s0 + $0x20] sm:$0xff]
    %v29 = vld [vmem:[%s0 + $0x28] sm:$0xff]
    %v30 = vld [vmem:[%s0 + $0x30] sm:$0xff]
    %v31 = vld [vmem:[%s0 + $0x38] sm:$0xff]
    %v32 = vld [vmem:[%s0 + $0x40] sm:$0xff]
    %v33 = vld [vmem:[%s0 + $0x48] sm:$0xff]
    %v34 = vld [vmem:[%s0 + $0x50] sm:$0xff]
    %v35 = vld [vmem:[%s0 + $0x58] sm:$0xff]
    %v36 = vld [vmem:[%s0 + $0x60] sm:$0xff]
    %v37 = vld [vmem:[%s0 + $0x68] sm:$0xff]
    %v38 = vld [vmem:[%s0 + $0x70] sm:$0xff]
    %v39 = vld [vmem:[%s0 + $0x78] sm:$0xff]
    %v40 = vld [vmem:[%s0 + $0x80] sm:$0xff]
    %v41 = vld [vmem:[%s0 + $0x88] sm:$0xff]
    %v42 = vld [vmem:[%s0 + $0x90] sm:$0xff]
    %v43 = vld [vmem:[%s0 + $0x98] sm:$0xff]
    %v44 = vld [vmem:[%s0 + $0xa0] sm:$0xff]
    %v45 = vld [vmem:[%s0 + $0xa8] sm:$0xff]
    %v46 = vld [vmem:[%s0 + $0xb0] sm:$0xff]
    %v47 = vld [vmem:[%s0 + $0xb8] sm:$0xff]
    %v48 = vld [vmem:[%s0 + $0xc0] sm:$0xff]
    %v49 = vld [vmem:[%s0 + $0xc8] sm:$0xff]
    %v50 = vld [vmem:[%s0 + $0xd0] sm:$0xff]
    %v51 = vld [vmem:[%s0 + $0xd8] sm:$0xff]
    %v52 = vld [vmem:[%s0 + $0xe0] sm:$0xff]
    %v53 = vld [vmem:[%s0 + $0xe8] sm:$0xff]
    %v54 = vld [vmem:[%s0 + $0xf0] sm:$0xff]
    %v55 = vld [vmem:[%s0 + $0xf8] sm:$0xff]
    %v56 = vpack.c.bf16 %v25, %v24
    %v57 = vpack.c.bf16 %v27, %v26
    %v58 = vpack.c.bf16 %v29, %v28
    %v59 = vpack.c.bf16 %v31, %v30
    %v60 = vpack.c.bf16 %v33, %v32
    %v61 = vpack.c.bf16 %v35, %v34
    %v62 = vpack.c.bf16 %v37, %v36
    %v63 = vpack.c.bf16 %v39, %v38
    %v64 = vpack.c.bf16 %v41, %v40
    %v65 = vpack.c.bf16 %v43, %v42
    %v66 = vpack.c.bf16 %v45, %v44
    %v67 = vpack.c.bf16 %v47, %v46
    %v68 = vpack.c.bf16 %v49, %v48
    %v69 = vpack.c.bf16 %v51, %v50
    %v70 = vpack.c.bf16 %v53, %v52
    %v71 = vpack.c.bf16 %v55, %v54
    %v72 = vld [vmem:[%s1] sm:$0xf]
    %v73 = vld [vmem:[%s1 + $0x4] sm:$0xf]
    %v74 = vld [vmem:[%s1 + $0x8] sm:$0xf]
    %v75 = vld [vmem:[%s1 + $0xc] sm:$0xf]
    %v76 = vld [vmem:[%s1 + $0x10] sm:$0xf]
    %v77 = vld [vmem:[%s1 + $0x14] sm:$0xf]
    %v78 = vld [vmem:[%s1 + $0x18] sm:$0xf]
    %v79 = vld [vmem:[%s1 + $0x1c] sm:$0xf]
    %v80 = vld [vmem:[%s1 + $0x20] sm:$0xf]
    %v81 = vld [vmem:[%s1 + $0x24] sm:$0xf]
    %v82 = vld [vmem:[%s1 + $0x28] sm:$0xf]
    %v83 = vld [vmem:[%s1 + $0x2c] sm:$0xf]
    %v84 = vld [vmem:[%s1 + $0x30] sm:$0xf]
    %v85 = vld [vmem:[%s1 + $0x34] sm:$0xf]
    %v86 = vld [vmem:[%s1 + $0x38] sm:$0xf]
    %v87 = vld [vmem:[%s1 + $0x3c] sm:$0xf]
    %v88 = vld [vmem:[%s2] sm:$0xff]
    %v89 = vld [vmem:[%s2 + $0x8] sm:$0xff]
    %v90 = vld [vmem:[%s2 + $0x10] sm:$0xff]
    %v91 = vld [vmem:[%s2 + $0x18] sm:$0xff]
    %v92 = vld [vmem:[%s2 + $0x20] sm:$0xff]
    %v93 = vld [vmem:[%s2 + $0x28] sm:$0xff]
    %v94 = vld [vmem:[%s2 + $0x30] sm:$0xff]
    %v95 = vld [vmem:[%s2 + $0x38] sm:$0xff]
    %v96 = vld [vmem:[%s2 + $0x40] sm:$0xff]
    %v97 = vld [vmem:[%s2 + $0x48] sm:$0xff]
    %v98 = vld [vmem:[%s2 + $0x50] sm:$0xff]
    %v99 = vld [vmem:[%s2 + $0x58] sm:$0xff]
    %v100 = vld [vmem:[%s2 + $0x60] sm:$0xff]
    %v101 = vld [vmem:[%s2 + $0x68] sm:$0xff]
    %v102 = vld [vmem:[%s2 + $0x70] sm:$0xff]
    %v103 = vld [vmem:[%s2 + $0x78] sm:$0xff]
    %105 = vset.pattern.permute.xlu0 0
    %106 = vperm.xlu0 %105, %v88
    %v107 = vpop.permute.xlu0 %106
    %110 = vset.pattern.permute.xlu0 0
    %111 = vperm.xlu0 %110, %v89
    %v112 = vpop.permute.xlu0 %111
    %115 = vset.pattern.permute.xlu0 0
    %116 = vperm.xlu0 %115, %v90
    %v117 = vpop.permute.xlu0 %116
    %120 = vset.pattern.permute.xlu0 0
    %121 = vperm.xlu0 %120, %v91
    %v122 = vpop.permute.xlu0 %121
    %125 = vset.pattern.permute.xlu0 0
    %126 = vperm.xlu0 %125, %v92
    %v127 = vpop.permute.xlu0 %126
    %130 = vset.pattern.permute.xlu0 0
    %131 = vperm.xlu0 %130, %v93
    %v132 = vpop.permute.xlu0 %131
    %135 = vset.pattern.permute.xlu0 0
    %136 = vperm.xlu0 %135, %v94
    %v137 = vpop.permute.xlu0 %136
    %140 = vset.pattern.permute.xlu0 0
    %141 = vperm.xlu0 %140, %v95
    %v142 = vpop.permute.xlu0 %141
    %145 = vset.pattern.permute.xlu0 0
    %146 = vperm.xlu0 %145, %v96
    %v147 = vpop.permute.xlu0 %146
    %150 = vset.pattern.permute.xlu0 0
    %151 = vperm.xlu0 %150, %v97
    %v152 = vpop.permute.xlu0 %151
    %155 = vset.pattern.permute.xlu0 0
    %156 = vperm.xlu0 %155, %v98
    %v157 = vpop.permute.xlu0 %156
    %160 = vset.pattern.permute.xlu0 0
    %161 = vperm.xlu0 %160, %v99
    %v162 = vpop.permute.xlu0 %161
    %165 = vset.pattern.permute.xlu0 0
    %166 = vperm.xlu0 %165, %v100
    %v167 = vpop.permute.xlu0 %166
    %170 = vset.pattern.permute.xlu0 0
    %171 = vperm.xlu0 %170, %v101
    %v172 = vpop.permute.xlu0 %171
    %175 = vset.pattern.permute.xlu0 0
    %176 = vperm.xlu0 %175, %v102
    %v177 = vpop.permute.xlu0 %176
    %180 = vset.pattern.permute.xlu0 0
    %181 = vperm.xlu0 %180, %v103
    %v182 = vpop.permute.xlu0 %181
    %v200 = vunpack.c.l.b16 %v72
    %v201 = vunpack.c.l.b16 %v73
    %v202 = vunpack.c.l.b16 %v74
    %v203 = vunpack.c.l.b16 %v75
    %v204 = vunpack.c.l.b16 %v76
    %v205 = vunpack.c.l.b16 %v77
    %v206 = vunpack.c.l.b16 %v78
    %v207 = vunpack.c.l.b16 %v79
    %v208 = vunpack.c.l.b16 %v80
    %v209 = vunpack.c.l.b16 %v81
    %v210 = vunpack.c.l.b16 %v82
    %v211 = vunpack.c.l.b16 %v83
    %v212 = vunpack.c.l.b16 %v84
    %v213 = vunpack.c.l.b16 %v85
    %v214 = vunpack.c.l.b16 %v86
    %v215 = vunpack.c.l.b16 %v87
    %v216 = vpack.c.b16 %v201, %v200
    %v217 = vpack.c.b16 %v203, %v202
    %v218 = vpack.c.b16 %v205, %v204
    %v219 = vpack.c.b16 %v207, %v206
    %v220 = vpack.c.b16 %v209, %v208
    %v221 = vpack.c.b16 %v211, %v210
    %v222 = vpack.c.b16 %v213, %v212
    %v223 = vpack.c.b16 %v215, %v214
    %vm224 = vcmask 261120
    %v226 = vsel %vm224, %v216, 0
    %v229 = vsel %vm224, %v217, 0
    %v232 = vsel %vm224, %v218, 0
    %v235 = vsel %vm224, %v219, 0
    %v238 = vsel %vm224, %v220, 0
    %v241 = vsel %vm224, %v221, 0
    %v244 = vsel %vm224, %v222, 0
    %v247 = vsel %vm224, %v223, 0
    %v250 = vsel %vm224, %v56, 0
    %v253 = vsel %vm224, %v57, 0
    %v256 = vsel %vm224, %v58, 0
    %v259 = vsel %vm224, %v59, 0
    %v262 = vsel %vm224, %v60, 0
    %v265 = vsel %vm224, %v61, 0
    %v268 = vsel %vm224, %v62, 0
    %v271 = vsel %vm224, %v63, 0
    %v274 = vsel %vm224, %v64, 0
    %v277 = vsel %vm224, %v65, 0
    %v280 = vsel %vm224, %v66, 0
    %v283 = vsel %vm224, %v67, 0
    %v286 = vsel %vm224, %v68, 0
    %v289 = vsel %vm224, %v69, 0
    %v292 = vsel %vm224, %v70, 0
    %v295 = vsel %vm224, %v71, 0
    %297 = vmatprep.subr.bf16.mxu0 0
    %298 = vmatpush1.bf16.xpose.msra.mxu0 %v250
    %299 = vmatprep.subr.bf16.mxu0 0
    %300 = vmatpush1.bf16.xpose.msra.mxu0 %v253
    %301 = vmatprep.subr.bf16.mxu0 0
    %302 = vmatpush1.bf16.xpose.msra.mxu0 %v256
    %303 = vmatprep.subr.bf16.mxu0 0
    %304 = vmatpush1.bf16.xpose.msra.mxu0 %v259
    %305 = vmatprep.subr.bf16.mxu0 0
    %306 = vmatpush1.bf16.xpose.msra.mxu0 %v262
    %307 = vmatprep.subr.bf16.mxu0 0
    %308 = vmatpush1.bf16.xpose.msra.mxu0 %v265
    %309 = vmatprep.subr.bf16.mxu0 0
    %310 = vmatpush1.bf16.xpose.msra.mxu0 %v268
    %311 = vmatprep.subr.bf16.mxu0 0
    %312 = vmatpush1.bf16.xpose.msra.mxu0 %v271
    %313 = vmatprep.subr.bf16.mxu0 0
    %314 = vmatpush1.bf16.xpose.msra.mxu0 %v274
    %315 = vmatprep.subr.bf16.mxu0 0
    %316 = vmatpush1.bf16.xpose.msra.mxu0 %v277
    %317 = vmatprep.subr.bf16.mxu0 0
    %318 = vmatpush1.bf16.xpose.msra.mxu0 %v280
    %319 = vmatprep.subr.bf16.mxu0 0
    %320 = vmatpush1.bf16.xpose.msra.mxu0 %v283
    %321 = vmatprep.subr.bf16.mxu0 0
    %322 = vmatpush1.bf16.xpose.msra.mxu0 %v286
    %323 = vmatprep.subr.bf16.mxu0 0
    %324 = vmatpush1.bf16.xpose.msra.mxu0 %v289
    %325 = vmatprep.subr.bf16.mxu0 0
    %326 = vmatpush1.bf16.xpose.msra.mxu0 %v292
    %327 = vmatprep.subr.bf16.mxu0 0
    %328 = vmatpush1.bf16.xpose.msra.mxu0 %v295
    %329 = vmatprep.mubr.bf16.mxu0 0
    %330 = vmatmul.mubr.bf16.gmra.mrb[0].mxu0 %v226
    %v331 = vpop.f32.mrb[0].mxu0
    %v332 = vadd.f32 %v107, %v331
    %v333 = vpop.f32.mrb[0].mxu0
    %v334 = vadd.f32 %v107, %v333
    %v335 = vpop.f32.mrb[0].mxu0
    %v336 = vadd.f32 %v112, %v335
    %v337 = vpop.f32.mrb[0].mxu0
    %v338 = vadd.f32 %v112, %v337
    %339 = vmatprep.mubr.bf16.mxu0 0
    %340 = vmatmul.mubr.bf16.gmra.mrb[0].mxu0 %v229
    %v341 = vpop.f32.mrb[0].mxu0
    %v342 = vadd.f32 %v117, %v341
    %v343 = vpop.f32.mrb[0].mxu0
    %v344 = vadd.f32 %v117, %v343
    %v345 = vpop.f32.mrb[0].mxu0
    %v346 = vadd.f32 %v122, %v345
    %v347 = vpop.f32.mrb[0].mxu0
    %v348 = vadd.f32 %v122, %v347
    %349 = vmatprep.mubr.bf16.mxu0 0
    %350 = vmatmul.mubr.bf16.gmra.mrb[0].mxu0 %v232
    %v351 = vpop.f32.mrb[0].mxu0
    %v352 = vadd.f32 %v127, %v351
    %v353 = vpop.f32.mrb[0].mxu0
    %v354 = vadd.f32 %v127, %v353
    %v355 = vpop.f32.mrb[0].mxu0
    %v356 = vadd.f32 %v132, %v355
    %v357 = vpop.f32.mrb[0].mxu0
    %v358 = vadd.f32 %v132, %v357
    %359 = vmatprep.mubr.bf16.mxu0 0
    %360 = vmatmul.mubr.bf16.gmra.mrb[0].mxu0 %v235
    %v361 = vpop.f32.mrb[0].mxu0
    %v362 = vadd.f32 %v137, %v361
    %v363 = vpop.f32.mrb[0].mxu0
    %v364 = vadd.f32 %v137, %v363
    %v365 = vpop.f32.mrb[0].mxu0
    %v366 = vadd.f32 %v142, %v365
    %v367 = vpop.f32.mrb[0].mxu0
    %v368 = vadd.f32 %v142, %v367
    %369 = vmatprep.mubr.bf16.mxu0 0
    %370 = vmatmul.mubr.bf16.gmra.mrb[0].mxu0 %v238
    %v371 = vpop.f32.mrb[0].mxu0
    %v372 = vadd.f32 %v147, %v371
    %v373 = vpop.f32.mrb[0].mxu0
    %v374 = vadd.f32 %v147, %v373
    %v375 = vpop.f32.mrb[0].mxu0
    %v376 = vadd.f32 %v152, %v375
    %v377 = vpop.f32.mrb[0].mxu0
    %v378 = vadd.f32 %v152, %v377
    %379 = vmatprep.mubr.bf16.mxu0 0
    %380 = vmatmul.mubr.bf16.gmra.mrb[0].mxu0 %v241
    %v381 = vpop.f32.mrb[0].mxu0
    %v382 = vadd.f32 %v157, %v381
    %v383 = vpop.f32.mrb[0].mxu0
    %v384 = vadd.f32 %v157, %v383
    %v385 = vpop.f32.mrb[0].mxu0
    %v386 = vadd.f32 %v162, %v385
    %v387 = vpop.f32.mrb[0].mxu0
    %v388 = vadd.f32 %v162, %v387
    %389 = vmatprep.mubr.bf16.mxu0 0
    %390 = vmatmul.mubr.bf16.gmra.mrb[0].mxu0 %v244
    %v391 = vpop.f32.mrb[0].mxu0
    %v392 = vadd.f32 %v167, %v391
    %v393 = vpop.f32.mrb[0].mxu0
    %v394 = vadd.f32 %v167, %v393
    %v395 = vpop.f32.mrb[0].mxu0
    %v396 = vadd.f32 %v172, %v395
    %v397 = vpop.f32.mrb[0].mxu0
    %v398 = vadd.f32 %v172, %v397
    %399 = vmatprep.mubr.bf16.mxu0 0
    %400 = vmatmul.mubr.bf16.gmra.mrb[0].mxu0 %v247
    %v401 = vpop.f32.mrb[0].mxu0
    %v402 = vadd.f32 %v177, %v401
    %v403 = vpop.f32.mrb[0].mxu0
    %v404 = vadd.f32 %v177, %v403
    %v405 = vpop.f32.mrb[0].mxu0
    %v406 = vadd.f32 %v182, %v405
    %v407 = vpop.f32.mrb[0].mxu0
    %v408 = vadd.f32 %v182, %v407
    %409 = vdwg.mxu0
    %v410 = vmax.f32 %v332, 0.0
    %v411 = vmax.f32 %v334, 0.0
    %v412 = vmax.f32 %v336, 0.0
    %v413 = vmax.f32 %v338, 0.0
    %v414 = vmax.f32 %v342, 0.0
    %v415 = vmax.f32 %v344, 0.0
    %v416 = vmax.f32 %v346, 0.0
    %v417 = vmax.f32 %v348, 0.0
    %v418 = vmax.f32 %v352, 0.0
    %v419 = vmax.f32 %v354, 0.0
    %v420 = vmax.f32 %v356, 0.0
    %v421 = vmax.f32 %v358, 0.0
    %v422 = vmax.f32 %v362, 0.0
    %v423 = vmax.f32 %v364, 0.0
    %v424 = vmax.f32 %v366, 0.0
    %v425 = vmax.f32 %v368, 0.0
    %v426 = vmax.f32 %v372, 0.0
    %v427 = vmax.f32 %v374, 0.0
    %v428 = vmax.f32 %v376, 0.0
    %v429 = vmax.f32 %v378, 0.0
    %v430 = vmax.f32 %v382, 0.0
    %v431 = vmax.f32 %v384, 0.0
    %v432 = vmax.f32 %v386, 0.0
    %v433 = vmax.f32 %v388, 0.0
    %v434 = vmax.f32 %v392, 0.0
    %v435 = vmax.f32 %v394, 0.0
    %v436 = vmax.f32 %v396, 0.0
    %v437 = vmax.f32 %v398, 0.0
    %v438 = vmax.f32 %v402, 0.0
    %v439 = vmax.f32 %v404, 0.0
    %v440 = vmax.f32 %v406, 0.0
    %v441 = vmax.f32 %v408, 0.0
    %v442 = vld [vmem:[%s3] sm:$0x1]
    %v443 = vpack.c.bf16 %v412, %v410
    %v444 = vpack.c.bf16 %v413, %v411
    %v445 = vpack.c.bf16 %v416, %v414
    %v446 = vpack.c.bf16 %v417, %v415
    %v447 = vpack.c.bf16 %v420, %v418
    %v448 = vpack.c.bf16 %v421, %v419
    %v449 = vpack.c.bf16 %v424, %v422
    %v450 = vpack.c.bf16 %v425, %v423
    %v451 = vpack.c.bf16 %v428, %v426
    %v452 = vpack.c.bf16 %v429, %v427
    %v453 = vpack.c.bf16 %v432, %v430
    %v454 = vpack.c.bf16 %v433, %v431
    %v455 = vpack.c.bf16 %v436, %v434
    %v456 = vpack.c.bf16 %v437, %v435
    %v457 = vpack.c.bf16 %v440, %v438
    %v458 = vpack.c.bf16 %v441, %v439
    %v459 = vld [vmem:[#allocation2] sm:$0x1]
    %461 = vset.pattern.permute.xlu0 0
    %462 = vperm.xlu0 %461, %v459
    %v463 = vpop.permute.xlu0 %462
    %v465 = vlaneseq
    %v466 = vshrl.u32 %v465, 7
    %v467 = vsub.s32 0, %v466
    %v468 = vrot.slane %v463, %v467
    %469 = vmatprep.subr.bf16.mxu0 %v444
    %470 = vmatpush1.bf16.msra.mxu0 %v443
    %471 = vmatprep.subr.bf16.mxu0 %v446
    %472 = vmatpush1.bf16.msra.mxu0 %v445
    %473 = vmatprep.subr.bf16.mxu0 %v448
    %474 = vmatpush1.bf16.msra.mxu0 %v447
    %475 = vmatprep.subr.bf16.mxu0 %v450
    %476 = vmatpush1.bf16.msra.mxu0 %v449
    %477 = vmatprep.subr.bf16.mxu0 %v452
    %478 = vmatpush1.bf16.msra.mxu0 %v451
    %479 = vmatprep.subr.bf16.mxu0 %v454
    %480 = vmatpush1.bf16.msra.mxu0 %v453
    %481 = vmatprep.subr.bf16.mxu0 %v456
    %482 = vmatpush1.bf16.msra.mxu0 %v455
    %483 = vmatprep.subr.bf16.mxu0 %v458
    %484 = vmatpush1.bf16.msra.mxu0 %v457
    %485 = vmatprep.subr.bf16.mxu0 0
    %486 = vmatpush1.bf16.msra.mxu0 0
    %487 = vmatprep.subr.bf16.mxu0 0
    %488 = vmatpush1.bf16.msra.mxu0 0
    %489 = vmatprep.subr.bf16.mxu0 0
    %490 = vmatpush1.bf16.msra.mxu0 0
    %491 = vmatprep.subr.bf16.mxu0 0
    %492 = vmatpush1.bf16.msra.mxu0 0
    %493 = vmatprep.subr.bf16.mxu0 0
    %494 = vmatpush1.bf16.msra.mxu0 0
    %495 = vmatprep.subr.bf16.mxu0 0
    %496 = vmatpush1.bf16.msra.mxu0 0
    %497 = vmatprep.subr.bf16.mxu0 0
    %498 = vmatpush1.bf16.msra.mxu0 0
    %499 = vmatprep.subr.bf16.mxu0 0
    %500 = vmatpush1.bf16.msra.mxu0 0
    %501 = vmatprep.mubr.bf16.mxu0 0
    %502 = vmatmul.mubr.bf16.gmra.mrb[0].mxu0 %v442
    %v503 = vpop.f32.mrb[0].mxu0
    %v504 = vadd.f32 %v468, %v503
    %v505 = vpop.f32.mrb[0].mxu0
    %v506 = vadd.f32 %v468, %v505
    %v507 = vpop.f32.mrb[0].mxu0
    %v508 = vpop.f32.mrb[0].mxu0
    %509 = vdwg.mxu0
    %v510 = vmul.f32 %v504, 0.5
    %v511 = vmul.f32 %v506, 0.5
    %v512 = vtanh.pop %v510
    %v513 = vtanh.pop %v511
    %v514 = vadd.f32 %v512, 1.0
    %v515 = vadd.f32 %v513, 1.0
    %v516 = vmul.f32 %v514, 0.5
    %v517 = vmul.f32 %v515, 0.5
    %v520 = vcombine.low %v516, %v517
    %v522 = vunpack.c.l.s4 1966171168
    %v523 = vunpack.c.0.s8 %v522
    %v524 = vlaneseq
    %v525 = vshrl.u32 %v524, 7
    %v526 = vsub.s32 %v523, %v525
    %v527 = vrot.slane %v520, %v526
    %v529 = vunpack.c.l.s4 1966171168
    %v530 = vunpack.c.0.s8 %v529
    %v531 = vlaneseq
    %v532 = vshrl.u32 %v531, 7
    %v533 = vsub.s32 %v530, %v532
    %v534 = vrot.slane %v527, %v533
    %v536 = vlaneseq
    %vm537 = vcmp.ge.s32.totalorder %v536, 0
    %vm538 = vcmp.lt.s32.totalorder %v536, 256
    %vm539 = vmand %vm537, %vm538
    %540 = vst.msk [vmem:[#allocation3] sm:$0x3] %vm539, %v534
    // Predicated region
    $region22: #{model_forward.1} parent=1 // pred_check
      _
    $region23: #{model_forward.1} parent=1 // pred_check_branch
      %542 = sbr.rel (0) target = $region25
    $region24: #{model_forward.1} parent=1 // pred_region
      %s544 = ssub.s32 32, 32
      %545 = vsyncadd [#allocation4], %s544
      %s547 = sshll.u32 [#allocation3], 4
      %s548 = int_to_ptr.vmem [resolvable:$true] %s547
      %550 = dma.vmem_to_hbm [thread:$0]  %s548, 32, %s5, [#allocation4]
    $region25: #{model_forward.1} parent=1 // pred_fallthru
      _
    // Predicated region
    $region26: #{model_forward.1} parent=1 // pred_check
      _
    $region27: #{model_forward.1} parent=1 // pred_check_branch
      %552 = sbr.rel (0) target = $region29
    $region28: #{model_forward.1} parent=1 // pred_region
      %553 = dma.done [#allocation4], 32
    $region29: #{model_forward.1} parent=1 // pred_fallthru
      _
    %554 = vsyncpa [#allocation4], 1

</llo_original>
